<compile_context>
chip_gen: v7x
topology: tpu7x:2x2x1
jax: 0.10.0
libtpu: 0.0.40
codegen_flags: <defaults>
</compile_context>

<pallas_src>
import math

import jax
import jax.numpy as jnp
from jax.experimental import pallas as pl
from jax.experimental.pallas import tpu as pltpu


def _build_pe(seq_len: int, d_model: int, dtype=jnp.float32) -> jnp.ndarray:
    """Deterministic positional-encoding buffer, identical to the torch __init__.

    Note: the reference module intentionally uses -log(2*seq_len)/d_model
    (NOT the classic -log(10000)/d_model); we reproduce that exactly.
    """
    position = jnp.arange(seq_len, dtype=jnp.float32)[:, None]              # [S, 1]
    div_term = jnp.exp(
        jnp.arange(0, d_model, 2, dtype=jnp.float32)
        * (-math.log(2 * seq_len) / d_model)
    )                                                                        # [ceil(D/2)]
    ang = position * div_term                                                # [S, ceil(D/2)]
    pe = jnp.zeros((1, seq_len, d_model), dtype=jnp.float32)
    pe = pe.at[0, :, 0::2].set(jnp.sin(ang))
    pe = pe.at[0, :, 1::2].set(jnp.cos(ang)[:, : d_model // 2])  # guard odd d_model
    return pe.astype(dtype)


def _pe_add_kernel(x_ref, pe_ref, o_ref):
    # (TB, TR) + (1, TR) broadcast add; minor dim is lane-dense.
    o_ref[...] = x_ref[...] + pe_ref[...]


def _round_up(a: int, m: int) -> int:
    return -(-a // m) * m


def _default_target_tile_bytes() -> int:
    """Per-generation per-step tile budget (bytes of one x block)."""
    kind = ""
    try:
        kind = jax.devices()[0].device_kind.lower()
    except Exception:
        pass
    if "v7" in kind or "tpu7" in kind:
        return 4 << 20          # 3.2 TB/s: bigger tiles to amortize per-step overhead
    # v5e / v6e / older: ~1 MiB is already ~85% of HBM roofline and stays well
    # under v5e's 16 MiB default scoped VMEM with double buffering.
    return 1 << 20


def _pick_block(batch: int, row: int, itemsize: int, target_tile_bytes: int):
    """Pick (tb, tr): batch rows and flattened-row elements per grid step.

    Constraints: tb == batch or a multiple of the sublane pack; tr == row or a
    multiple of the lane granularity; tb*tr*itemsize stays ~<= target.
    """
    lane_mult = 128 * max(1, 4 // itemsize)   # 128 f32, 256 bf16, 512 int8
    sublane = max(8, 32 // max(1, itemsize))  # 8 f32, 16 bf16, 32 int8
    target_elems = max(lane_mult, target_tile_bytes // itemsize)

    # Case 1: whole array in a single block.
    if batch * row <= target_elems:
        return batch, row, sublane, lane_mult

    # Case 2: full rows, several batch rows per block, without exceeding target.
    rows_fit = target_elems // row
    if rows_fit >= sublane:
        tb = min(batch, (rows_fit // sublane) * sublane)
        return tb, row, sublane, lane_mult

    # Case 3: long rows -> tile the flattened row axis too.  Keep the sublane
    # dim at the packing granularity (or the full batch if smaller) and give
    # the rest of the budget to lanes.
    tb = batch if batch <= sublane else sublane
    tr = max(lane_mult, ((target_elems // tb) // lane_mult) * lane_mult)
    tr = min(tr, row)
    return tb, tr, sublane, lane_mult


def _ensure_two_steps(batch, row, tb, tr, itemsize, sublane, lane_mult,
                      min_step_bytes=512 * 1024):
    """v7x has 2 TensorCores; make sure the 'parallel' grid has >= 2 steps
    whenever each step would still move >= ~512 KiB."""
    if pl.cdiv(batch, tb) * pl.cdiv(row, tr) >= 2:
        return tb, tr
    if batch * row * itemsize < 2 * min_step_bytes:
        return tb, tr
    half_b = _round_up(-(-batch // 2), sublane)
    if half_b < batch:                      # split the batch axis (keeps pe resident)
        return half_b, tr
    half_r = _round_up(-(-row // 2), lane_mult)
    if half_r < row:                        # fall back to splitting the row axis
        return tb, half_r
    return tb, tr


def positional_encoding_forward(
    x: jnp.ndarray,
    pe: jnp.ndarray,
    *,
    min_pallas_bytes: int = 256 * 1024,
    target_tile_bytes: int | None = None,
    donate_input: bool = False,
) -> jnp.ndarray:
    """x: [B, S, D], pe: [1, S, D] -> [B, S, D]."""
    B, S, D = x.shape
    assert pe.shape == (1, S, D)
    pe = pe.astype(x.dtype)

    itemsize = jnp.dtype(x.dtype).itemsize

    # Below the threshold, kernel-launch + pipeline overhead dwarfs the data
    # movement; XLA's fused broadcast add is already optimal.
    # (Pass min_pallas_bytes=0 to force the Pallas path, e.g. for testing.)
    if x.size * itemsize < min_pallas_bytes:
        return x + pe

    if target_tile_bytes is None:
        target_tile_bytes = _default_target_tile_bytes()

    # Lane-dense layout: collapse (S, D) into one minor dim of size S*D
    # (a contiguous reshape -> bitcast, no HBM traffic).
    row = S * D
    x2 = x.reshape(B, row)
    pe2 = pe.reshape(1, row)

    tb, tr, sublane, lane_mult = _pick_block(B, row, itemsize, target_tile_bytes)
    tb, tr = _ensure_two_steps(B, row, tb, tr, itemsize, sublane, lane_mult)

    n_r = pl.cdiv(row, tr)
    n_b = pl.cdiv(B, tb)
    # Batch axis last -> iterates fastest -> pe block index constant across the
    # inner loop, so the shared pe tile is DMA'd once per row chunk.
    grid = (n_r, n_b)

    # Explicit VMEM budget: x + out double-buffered, pe double-buffered
    # (its (1, tr) block pads up to a full sublane group), plus headroom.
    pad_tb = _round_up(tb, sublane)
    pad_tr = _round_up(tr, 128)
    x_block_vmem = pad_tb * pad_tr * itemsize
    pe_block_vmem = sublane * pad_tr * itemsize
    vmem_limit = 2 * (2 * x_block_vmem) + 2 * pe_block_vmem
    vmem_limit = int(vmem_limit * 1.25) + (2 << 20)
    vmem_limit = max(16 << 20, min(vmem_limit, 48 << 20))  # stays under v7x's 64 MiB

    extra = {}
    if donate_input:
        # Reuse x2's HBM buffer for the output (caller must donate x).
        extra["input_output_aliases"] = {0: 0}

    out2 = pl.pallas_call(
        _pe_add_kernel,
        out_shape=jax.ShapeDtypeStruct((B, row), x.dtype),
        grid_spec=pl.GridSpec(
            grid=grid,
            in_specs=[
                pl.BlockSpec((tb, tr), lambda r, b: (b, r)),   # x batch/row tile
                pl.BlockSpec((1, tr), lambda r, b: (0, r)),    # shared pe row chunk
            ],
            out_specs=pl.BlockSpec((tb, tr), lambda r, b: (b, r)),
        ),
        compiler_params=pltpu.CompilerParams(
            # Both axes are independent; lets v7x shard steps across its 2 TCs.
            dimension_semantics=("parallel", "parallel"),
            vmem_limit_bytes=vmem_limit,
        ),
        **extra,
    )(x2, pe2)

    return out2.reshape(B, S, D)


if __name__ == "__main__":
    # Small shapes consistent with the module: d_model (dim_transformer) = 32,
    # seq_len (feat_seq_len) = 8, batch = 2.
    batch, seq_len, d_model = 2, 8, 32

    key = jax.random.PRNGKey(0)
    x = jax.random.normal(key, (batch, seq_len, d_model), dtype=jnp.float32)

    pe = _build_pe(seq_len, d_model, dtype=x.dtype)

    # Reference: plain-JAX broadcast add (also the dispatch path real workloads
    # below the size threshold would take).
    ref = x + pe

    # Force the Pallas path for this tiny demo so the kernel actually runs
    # (single-block path).
    out = positional_encoding_forward(x, pe, min_pallas_bytes=0)
    out = jax.block_until_ready(out)
    assert out.shape == x.shape and out.dtype == x.dtype
    assert jnp.allclose(out, ref, atol=1e-6, rtol=1e-6)

    # Also exercise the two-axis (row-tiled) path by forcing a tiny tile budget.
    out_tiled = positional_encoding_forward(
        x, pe, min_pallas_bytes=0, target_tile_bytes=1024)
    out_tiled = jax.block_until_ready(out_tiled)
    assert jnp.allclose(out_tiled, ref, atol=1e-6, rtol=1e-6)

    print("KERNEL_OK")
</pallas_src>

<mosaic_0001>
module attributes {stable_mosaic.version = 11 : i64} {
  func.func @_pe_add_kernel(%arg0: i32, %arg1: i32, %arg2: memref<2x256xf32, #tpu.memory_space<vmem>>, %arg3: memref<1x256xf32, #tpu.memory_space<vmem>>, %arg4: memref<2x256xf32, #tpu.memory_space<vmem>>) attributes {dimension_semantics = [#tpu.dimension_semantics<parallel>, #tpu.dimension_semantics<parallel>], iteration_bounds = array<i64: 1, 1>, scalar_prefetch = 0 : i64, scratch_operands = 0 : i64, tpu.core_type = #tpu.core_type<tc>, window_params = [{transform_indices = @transform_0, window_bounds = array<i64: 2, 256>}, {transform_indices = @transform_1, window_bounds = array<i64: 1, 256>}, {transform_indices = @transform_2, window_bounds = array<i64: 2, 256>}]} {
    %c0 = arith.constant 0 : index
    %c0_0 = arith.constant 0 : index
    %0 = vector.load %arg2[%c0, %c0_0] : memref<2x256xf32, #tpu.memory_space<vmem>>, vector<2x256xf32>
    %c0_1 = arith.constant 0 : index
    %c0_2 = arith.constant 0 : index
    %1 = vector.load %arg3[%c0_1, %c0_2] : memref<1x256xf32, #tpu.memory_space<vmem>>, vector<1x256xf32>
    %2 = vector.broadcast %1 : vector<1x256xf32> to vector<2x256xf32>
    %3 = arith.addf %0, %2 : vector<2x256xf32>
    %c0_3 = arith.constant 0 : index
    %c0_4 = arith.constant 0 : index
    %4 = vector.load %arg4[%c0_3, %c0_4] : memref<2x256xf32, #tpu.memory_space<vmem>>, vector<2x256xf32>
    tpu.vector_store %arg4[%c0_3, %c0_4], %3 {strides = array<i32>} : memref<2x256xf32, #tpu.memory_space<vmem>>, vector<2x256xf32>,
    return
  }
  func.func @transform_0(%arg0: i32, %arg1: i32) -> (i32, i32) {
    %c0_i32 = arith.constant 0 : i32
    return %arg1, %arg0 : i32, i32
  }
  func.func @transform_1(%arg0: i32, %arg1: i32) -> (i32, i32) {
    %c0_i32 = arith.constant 0 : i32
    %c0_i32_0 = arith.constant 0 : i32
    return %c0_i32, %arg0 : i32, i32
  }
  func.func @transform_2(%arg0: i32, %arg1: i32) -> (i32, i32) {
    %c0_i32 = arith.constant 0 : i32
    return %arg1, %arg0 : i32, i32
  }
}

</mosaic_0001>

<llo_original>
// kernel: tpu_custom_call.1
$region0: #{tpu_custom_call.1}
  #allocation0 [shape = 'u32[]', space=smem, size = 0x4, offset = 0x4, fixed_abs, tag = 'smem constant byte address 0x4 - core index']
  #allocation1 [shape = 'u32[144,128]{1,0:T(1,128)}', space=vmem, size = 0x12000, scoped, tag = 'internal scratch']
  %s0 = inlined_call_operand.hbm [shape: f32[2,256], index: 0, kind: input, shape index: {}]
  %s1 = inlined_call_operand.vmem [shape: f32[1,256], index: 1, kind: input, shape index: {}]
  %s2 = inlined_call_operand.hbm [shape: f32[2,256], index: 2, kind: output, shape index: {}]
  %s3 = sld [smem:[#allocation0]]
  $region22: #{tpu_custom_call.1} parent=0
    _
  %s5 = ssub.s32 1, %s3
  %s6 = scalar_select 0, %s5, %s3
  $region1: #{tpu_custom_call.1} parent=0
    #allocation2 [shape = 'u8[2048]{0}', space=vmem, size = 0x800, scoped, tag = 'input window, operand 0, single buffered']
    #allocation3 [shape = 's32[1]{0}', space=sflag, size = 0x4, scoped, tag = 'scoped memory for tpu_custom_call.1']
    #allocation4 [shape = 's32[1]{0}', space=sflag, size = 0x4, scoped, tag = 'scoped memory for tpu_custom_call.1']
    #allocation5 [shape = 'u8[2048]{0}', space=vmem, size = 0x800, scoped, tag = 'output window, operand 0, single buffered']
    %7 = vsyncpa [#allocation3], 0
    %8 = vsyncpa [#allocation4], 0
    // Predicated region
    $region2: #{tpu_custom_call.1} parent=1 // pred_check
      _
    $region3: #{tpu_custom_call.1} parent=1 // pred_check_branch
      %10 = sbr.rel (0) target = $region5
    $region4: #{tpu_custom_call.1} parent=1 // pred_region
      %s12 = ssub.s32 64, 64
      %13 = vsyncadd [#allocation3], %s12
      %s15 = sshll.u32 [#allocation2], 4
      %s16 = int_to_ptr.vmem [resolvable:$true] %s15
      %18 = dma.hbm_to_vmem [thread:$0]  %s0, 64, %s16, [#allocation3]
    $region5: #{tpu_custom_call.1} parent=1 // pred_fallthru
      _
    // Predicated region
    $region6: #{tpu_custom_call.1} parent=1 // pred_check
      _
    $region7: #{tpu_custom_call.1} parent=1 // pred_check_branch
      %20 = sbr.rel (0) target = $region9
    $region8: #{tpu_custom_call.1} parent=1 // pred_region
      _
    $region9: #{tpu_custom_call.1} parent=1 // pred_fallthru
      _
    // Predicated region
    $region10: #{tpu_custom_call.1} parent=1 // pred_check
      _
    $region11: #{tpu_custom_call.1} parent=1 // pred_check_branch
      %22 = sbr.rel (0) target = $region13
    $region12: #{tpu_custom_call.1} parent=1 // pred_region
      %23 = dma.done [#allocation3], 64
    $region13: #{tpu_custom_call.1} parent=1 // pred_fallthru
      _
    %v24 = vld [vmem:[#allocation2] sm:$0xf]
    %v25 = vld [vmem:[%s1] sm:$0x3]
    %v27 = vlaneseq
    %v28 = vshrl.u32 %v27, 7
    %v29 = vsub.s32 0, %v28
    %v30 = vrot.slane %v25, %v29
    %v31 = vlaneseq
    %v32 = vshrl.u32 %v31, 7
    %v33 = vsub.s32 1, %v32
    %v34 = vrot.slane %v25, %v33
    %v35 = vcombine.low %v30, %v34
    %v37 = vunpack.c.l.s4 1983009808
    %v38 = vunpack.c.0.s8 %v37
    %v39 = vlaneseq
    %v40 = vshrl.u32 %v39, 7
    %v41 = vsub.s32 %v38, %v40
    %v42 = vrot.slane %v35, %v41
    %v44 = vadd.f32 %v24, %v42
    %45 = vst [vmem:[#allocation5] sm:$0xf] %v44
    // Predicated region
    $region14: #{tpu_custom_call.1} parent=1 // pred_check
      _
    $region15: #{tpu_custom_call.1} parent=1 // pred_check_branch
      %47 = sbr.rel (0) target = $region17
    $region16: #{tpu_custom_call.1} parent=1 // pred_region
      %s49 = ssub.s32 64, 64
      %50 = vsyncadd [#allocation4], %s49
      %s52 = sshll.u32 [#allocation5], 4
      %s53 = int_to_ptr.vmem [resolvable:$true] %s52
      %55 = dma.vmem_to_hbm [thread:$0]  %s53, 64, %s2, [#allocation4]
    $region17: #{tpu_custom_call.1} parent=1 // pred_fallthru
      _
    // Predicated region
    $region18: #{tpu_custom_call.1} parent=1 // pred_check
      _
    $region19: #{tpu_custom_call.1} parent=1 // pred_check_branch
      %57 = sbr.rel (0) target = $region21
    $region20: #{tpu_custom_call.1} parent=1 // pred_region
      %58 = dma.done [#allocation4], 64
    $region21: #{tpu_custom_call.1} parent=1 // pred_fallthru
      _
    %59 = vsyncpa [#allocation3], 1
    %60 = vsyncpa [#allocation4], 1

</llo_original>
